<compile_context>
chip_gen: v5e
topology: v5e:2x2
jax: 0.10.0
libtpu: 0.0.40
codegen_flags: <defaults>
</compile_context>

<pallas_src>
import functools

import jax
import jax.numpy as jnp
from jax import lax
from jax.experimental import pallas as pl
from jax.experimental.pallas import tpu as pltpu


def _round_up(x, m):
    return -(-x // m) * m


@functools.lru_cache(maxsize=None)
def _vmem_budgets():
    """Returns (tile_budget_bytes, vmem_limit_bytes), generation-aware.

    v5e/v6e: 128 MiB physical VMEM -> 32 MiB double-buffered input budget.
    v7x (or unknown): 64 MiB physical -> conservative 16 MiB budget.
    """
    vmem = None
    try:
        info = pltpu.get_tpu_info()
        vmem = getattr(info, "vmem_capacity_bytes", None)
    except Exception:
        vmem = None
    if vmem is not None and vmem >= 100 * (1 << 20):
        return 32 * (1 << 20), 64 * (1 << 20)
    return 16 * (1 << 20), 32 * (1 << 20)


# ---------------------------------------------------------------------------
# Kernel 1: mean over the last (lane) axis of an [M, K] slab.
# Grid = (M tiles [parallel], K tiles [arbitrary]); f32 accumulator in VMEM.
# When `chunked`, the accumulator is (tm, 128) and updated with pure VALU adds
# (one 128-lane chunk at a time); the cross-lane reduce happens only once, at
# the last K step.  The ragged K tail (if any) is masked only on its own step.
# ---------------------------------------------------------------------------
def _mean_last_kernel(x_ref, o_ref, acc_ref, *, inv_k, true_k, tk, chunked):
    k = pl.program_id(1)
    nk = pl.num_programs(1)

    @pl.when(k == 0)
    def _():
        acc_ref[...] = jnp.zeros_like(acc_ref)

    ragged = (true_k % tk) != 0  # static Python bool

    def accumulate(mask_tail):
        if chunked:
            tm = acc_ref.shape[0]
            if mask_tail:
                col = lax.broadcasted_iota(jnp.int32, (tm, 128), 1)
                base = k * tk
            for c in range(tk // 128):
                x = x_ref[:, c * 128:(c + 1) * 128].astype(jnp.float32)
                if mask_tail:
                    x = jnp.where(col < (true_k - base - c * 128), x, 0.0)
                acc_ref[...] += x
        else:
            x = x_ref[...].astype(jnp.float32)
            if mask_tail:
                col = lax.broadcasted_iota(jnp.int32, x.shape, 1)
                x = jnp.where(col < (true_k - k * tk), x, 0.0)
            acc_ref[...] += jnp.sum(x, axis=-1, keepdims=True)

    if ragged:
        @pl.when(k < nk - 1)
        def _():
            accumulate(False)

        @pl.when(k == nk - 1)
        def _():
            accumulate(True)
    else:
        accumulate(False)

    @pl.when(k == nk - 1)
    def _():
        if chunked:
            s = jnp.sum(acc_ref[...], axis=-1, keepdims=True)
        else:
            s = acc_ref[...]
        o_ref[...] = (s * inv_k).astype(o_ref.dtype)


def _mean_last_axis(x2d):
    """[M, K] -> [M, 1], mean over K (f32 accumulation)."""
    M, K = x2d.shape
    dtype = x2d.dtype
    item = dtype.itemsize
    budget, vmem_limit = _vmem_budgets()
    per_buf = budget // 2  # one of the two pipelined input buffers

    # Degenerate small-M shapes (e.g. full reduction -> M == 1): an (M, tk)
    # block cannot reach a multi-MiB tile.  Re-view the reduction axis as
    # [M, K//b, b] (free reshape) and run the sublane-reduction kernel; the
    # tiny second-stage mean over the b equal-sized groups is exact.
    if M < 8 and K >= 1024:
        for b in (1024, 512, 256, 128):
            if K % b == 0:
                part = _mean_mid_axis(jnp.reshape(x2d, (M, K // b, b)))
                return jnp.mean(part.astype(jnp.float32), axis=-1,
                                keepdims=True).astype(dtype)
        # TODO(synk): M < 8 with K not a multiple of 128 still lands on small
        # (M, tk) tiles below; a flat two-stage reduction would fix it.

    min_rows = M if M < 8 else 8

    # ---- reduction (lane) tile tk ----
    if min_rows * K * item <= per_buf:
        tk = K                                   # whole extent: no masking
    else:
        rows_target = min(_round_up(M, 8), 512)  # rows tm is expected to supply
        tk = per_buf // (rows_target * item)
        tk = max(128, min(tk // 128 * 128, 32768))
    nk = pl.cdiv(K, tk)
    chunked = (tk % 128 == 0) and (tk // 128 <= 128)

    # ---- kept-axis tile tm: fill the VMEM budget ----
    tm_max = per_buf // (tk * item)
    tm_max = max(min_rows, tm_max // 8 * 8)
    if M <= tm_max:
        if M >= 16:
            tm = max(8, _round_up(-(-M // 2), 8))  # >=2 blocks for v7x megacore
        else:
            tm = M                                 # full-dim block
    else:
        tm = tm_max
    nm = pl.cdiv(M, tm)

    acc_shape = (tm, 128) if chunked else (tm, 1)
    cost = pl.CostEstimate(
        flops=int(M) * int(K), transcendentals=0,
        bytes_accessed=int(M) * int(K) * item + int(M) * item)

    return pl.pallas_call(
        functools.partial(_mean_last_kernel, inv_k=1.0 / float(K),
                          true_k=K, tk=tk, chunked=chunked),
        out_shape=jax.ShapeDtypeStruct((M, 1), dtype),
        grid_spec=pltpu.PrefetchScalarGridSpec(
            num_scalar_prefetch=0,
            grid=(nm, nk),
            in_specs=[pl.BlockSpec((tm, tk), lambda i, k: (i, k))],
            out_specs=pl.BlockSpec((tm, 1), lambda i, k: (i, 0)),
            scratch_shapes=[pltpu.VMEM(acc_shape, jnp.float32)],
        ),
        compiler_params=pltpu.CompilerParams(
            dimension_semantics=("parallel", "arbitrary"),
            vmem_limit_bytes=vmem_limit,
        ),
        cost_estimate=cost,
    )(x2d)


# ---------------------------------------------------------------------------
# Kernel 2: mean over the middle axis of an [A, R, B] slab (sublane reduce,
# lane-dense output).  Grid = (A tiles, B tiles [parallel], R tiles [arbitrary]).
# Only the ragged R tail block (if any) is masked; ragged A/B tails only feed
# output rows/cols that Pallas never writes back.
# ---------------------------------------------------------------------------
def _mean_mid_kernel(x_ref, o_ref, acc_ref, *, inv_r, true_r, tr):
    r = pl.program_id(2)
    nr = pl.num_programs(2)

    @pl.when(r == 0)
    def _():
        acc_ref[...] = jnp.zeros_like(acc_ref)

    ragged = (true_r % tr) != 0  # static Python bool

    def accumulate(mask_tail):
        x = x_ref[...].astype(jnp.float32)          # (ta, tr, tb)
        if mask_tail:
            row = lax.broadcasted_iota(jnp.int32, x.shape, 1)
            x = jnp.where(row < (true_r - r * tr), x, 0.0)
        acc_ref[...] += jnp.sum(x, axis=1)          # sublane reduce -> (ta, tb)

    if ragged:
        @pl.when(r < nr - 1)
        def _():
            accumulate(False)

        @pl.when(r == nr - 1)
        def _():
            accumulate(True)
    else:
        accumulate(False)

    @pl.when(r == nr - 1)
    def _():
        o_ref[...] = (acc_ref[...] * inv_r).astype(o_ref.dtype)


def _mean_mid_axis(x3d):
    """[A, R, B] -> [A, B], mean over the middle axis (no XLA transpose)."""
    A, R, B = x3d.shape
    dtype = x3d.dtype
    item = dtype.itemsize
    budget, vmem_limit = _vmem_budgets()
    per_buf = budget // 2

    # lane tile over the trailing kept axis; ragged tail cols are just dropped
    tb = B if B <= 1024 else 1024
    nb = pl.cdiv(B, tb)

    min_a = A if A < 8 else 8

    # reduction (sublane) tile tr, sized so a minimal-leading-row block fits
    if min_a * R * tb * item <= per_buf:
        tr = R                                      # full extent: no masking
    else:
        tr = per_buf // (min_a * tb * item)
        tr = max(8, tr // 8 * 8)
    nr = pl.cdiv(R, tr)

    # leading kept-axis tile ta (also the sublane dim of the OUTPUT block)
    ta_max = per_buf // (tr * tb * item)
    ta_max = max(min_a, ta_max // 8 * 8)
    if A <= ta_max:
        if A >= 16 and nb == 1:
            ta = max(8, _round_up(-(-A // 2), 8))   # >=2 parallel blocks (v7x)
        else:
            ta = A
    else:
        ta = ta_max
    na = pl.cdiv(A, ta)

    cost = pl.CostEstimate(
        flops=int(A) * int(R) * int(B), transcendentals=0,
        bytes_accessed=int(A) * int(R) * int(B) * item + int(A) * int(B) * item)

    return pl.pallas_call(
        functools.partial(_mean_mid_kernel, inv_r=1.0 / float(R),
                          true_r=R, tr=tr),
        out_shape=jax.ShapeDtypeStruct((A, B), dtype),
        grid_spec=pltpu.PrefetchScalarGridSpec(
            num_scalar_prefetch=0,
            grid=(na, nb, nr),
            in_specs=[pl.BlockSpec((ta, tr, tb), lambda a, b, r: (a, r, b))],
            out_specs=pl.BlockSpec((ta, tb), lambda a, b, r: (a, b)),
            scratch_shapes=[pltpu.VMEM((ta, tb), jnp.float32)],
        ),
        compiler_params=pltpu.CompilerParams(
            dimension_semantics=("parallel", "parallel", "arbitrary"),
            vmem_limit_bytes=vmem_limit,
        ),
        cost_estimate=cost,
    )(x3d)


# ---------------------------------------------------------------------------
# Wrapper: torch.Tensor.mean(dim, keepdim=keep_dim) semantics.
# ---------------------------------------------------------------------------
def mean_pallas(x, dim, keep_dim=False):
    if not jnp.issubdtype(x.dtype, jnp.floating):
        raise TypeError(
            "mean_pallas only supports floating-point inputs "
            "(PyTorch also rejects integer mean without an explicit dtype).")

    ndim = x.ndim
    if isinstance(dim, (list, tuple)):
        dims = tuple(int(d) for d in dim)
    else:
        dims = (int(dim),)
    dims = tuple(sorted(set(d % ndim for d in dims)))
    kept = tuple(d for d in range(ndim) if d not in dims)
    kept_shape = tuple(x.shape[d] for d in kept)

    red_size = 1
    for d in dims:
        red_size *= x.shape[d]
    kept_size = 1
    for s in kept_shape:
        kept_size *= s

    if red_size == 0 or kept_size == 0:
        # torch: mean over an empty extent is NaN; empty kept dims -> empty out
        out = jnp.full(kept_shape, jnp.nan, dtype=x.dtype)
    else:
        contiguous = all(b - a == 1 for a, b in zip(dims[:-1], dims[1:]))
        d0, d1 = dims[0], dims[-1]

        if contiguous and d1 == ndim - 1:
            # Trailing reduction: flatten to [M, K] (metadata-only reshape).
            out = _mean_last_axis(jnp.reshape(x, (kept_size, red_size)))
            out = jnp.reshape(out, kept_shape)
        elif contiguous:
            # Contiguous middle block: [A, R, B], sublane reduction in-kernel.
            A = 1
            for s in x.shape[:d0]:
                A *= s
            B = 1
            for s in x.shape[d1 + 1:]:
                B *= s
            out = _mean_mid_axis(jnp.reshape(x, (A, red_size, B)))
            out = jnp.reshape(out, kept_shape)
        else:
            # TODO(synk): non-contiguous reduction dims still pay one XLA
            # transpose (an extra HBM read+write) before the [M, K] kernel.
            perm = kept + dims
            xt = jnp.transpose(x, perm)
            out = _mean_last_axis(jnp.reshape(xt, (kept_size, red_size)))
            out = jnp.reshape(out, kept_shape)

    if keep_dim:
        full = list(x.shape)
        for d in dims:
            full[d] = 1
        out = jnp.reshape(out, tuple(full))
    return out


if __name__ == "__main__":
    key = jax.random.PRNGKey(0)
    x = jax.random.normal(key, (2, 4, 16, 16), dtype=jnp.float32)  # NCHW

    # Global-average-pool style mean over spatial dims (trailing-axis kernel).
    y = jax.block_until_ready(mean_pallas(x, dim=(2, 3), keep_dim=False))
    assert y.shape == (2, 4)
    assert jnp.allclose(y, jnp.mean(x, axis=(2, 3)), atol=1e-5, rtol=1e-5)

    # Channel mean with keep_dim (middle-axis kernel, no XLA transpose).
    z = jax.block_until_ready(mean_pallas(x, dim=1, keep_dim=True))
    assert z.shape == (2, 1, 16, 16)
    assert jnp.allclose(z, jnp.mean(x, axis=1, keepdims=True), atol=1e-5, rtol=1e-5)

    # Leading-dims reduction (middle-axis kernel with A == 1).
    w = jax.block_until_ready(mean_pallas(x, dim=(0, 1), keep_dim=False))
    assert w.shape == (16, 16)
    assert jnp.allclose(w, jnp.mean(x, axis=(0, 1)), atol=1e-5, rtol=1e-5)

    # Non-contiguous dims (transpose fallback; megacore-split kept axis).
    u = jax.block_until_ready(mean_pallas(x, dim=(1, 3), keep_dim=True))
    assert u.shape == (2, 1, 16, 1)
    assert jnp.allclose(u, jnp.mean(x, axis=(1, 3), keepdims=True),
                        atol=1e-5, rtol=1e-5)

    # Full reduction (small-M reroute through the mid-axis kernel).
    t = jax.block_until_ready(mean_pallas(x, dim=(0, 1, 2, 3), keep_dim=False))
    assert t.shape == ()
    assert jnp.allclose(t, jnp.mean(x), atol=1e-5, rtol=1e-5)

    # Non-128-aligned extents (full-dim lane block + ragged kept-axis tail,
    # no padding anywhere).
    x2 = jax.random.normal(jax.random.PRNGKey(1), (2, 3, 13, 20), dtype=jnp.float32)
    v = jax.block_until_ready(mean_pallas(x2, dim=3, keep_dim=False))
    assert v.shape == (2, 3, 13)
    assert jnp.allclose(v, jnp.mean(x2, axis=3), atol=1e-5, rtol=1e-5)

    # bfloat16 path (f32 accumulation inside the kernel).
    xb = x.astype(jnp.bfloat16)
    yb = jax.block_until_ready(mean_pallas(xb, dim=(2, 3), keep_dim=False))
    assert yb.shape == (2, 4)
    assert jnp.allclose(yb.astype(jnp.float32),
                        jnp.mean(xb.astype(jnp.float32), axis=(2, 3)),
                        atol=2e-2, rtol=2e-2)

    print("KERNEL_OK")
</pallas_src>

<mosaic_0001>
module attributes {stable_mosaic.version = 11 : i64} {
  func.func @_mean_last_kernel(%arg0: i32, %arg1: i32, %arg2: memref<8x256xf32, #tpu.memory_space<vmem>>, %arg3: memref<8x1xf32, #tpu.memory_space<vmem>>, %arg4: memref<8x128xf32, #tpu.memory_space<vmem>>) attributes {dimension_semantics = [#tpu.dimension_semantics<parallel>, #tpu.dimension_semantics<arbitrary>], iteration_bounds = array<i64: 1, 1>, scalar_prefetch = 0 : i64, scratch_operands = 1 : i64, tpu.core_type = #tpu.core_type<tc>, window_params = [{transform_indices = @transform_0, window_bounds = array<i64: 8, 256>}, {transform_indices = @transform_1, window_bounds = array<i64: 8, 1>}]} {
    %c0_i32 = arith.constant 0 : i32
    %0 = arith.cmpi eq, %arg1, %c0_i32 : i32
    %1 = arith.extui %0 : i1 to i32
    %c0_i32_0 = arith.constant 0 : i32
    %2 = arith.cmpi ne, %1, %c0_i32_0 : i32
    scf.if %2 {
      %cst = arith.constant 0.000000e+00 : f32
      %14 = vector.broadcast %cst : f32 to vector<8x128xf32>
      %c0_13 = arith.constant 0 : index
      %c0_14 = arith.constant 0 : index
      %15 = vector.load %arg4[%c0_13, %c0_14] : memref<8x128xf32, #tpu.memory_space<vmem>>, vector<8x128xf32>
      tpu.vector_store %arg4[%c0_13, %c0_14], %14 {strides = array<i32>} : memref<8x128xf32, #tpu.memory_space<vmem>>, vector<8x128xf32>,
    } else {
    }
    %c0 = arith.constant 0 : index
    %c0_1 = arith.constant 0 : index
    %3 = vector.load %arg2[%c0, %c0_1] : memref<8x256xf32, #tpu.memory_space<vmem>>, vector<8x128xf32>
    %c0_2 = arith.constant 0 : index
    %c0_3 = arith.constant 0 : index
    %4 = vector.load %arg4[%c0_2, %c0_3] : memref<8x128xf32, #tpu.memory_space<vmem>>, vector<8x128xf32>
    %5 = arith.addf %4, %3 : vector<8x128xf32>
    %c0_4 = arith.constant 0 : index
    %c0_5 = arith.constant 0 : index
    %6 = vector.load %arg4[%c0_4, %c0_5] : memref<8x128xf32, #tpu.memory_space<vmem>>, vector<8x128xf32>
    tpu.vector_store %arg4[%c0_4, %c0_5], %5 {strides = array<i32>} : memref<8x128xf32, #tpu.memory_space<vmem>>, vector<8x128xf32>,
    %c0_6 = arith.constant 0 : index
    %c128 = arith.constant 128 : index
    %7 = vector.load %arg2[%c0_6, %c128] : memref<8x256xf32, #tpu.memory_space<vmem>>, vector<8x128xf32>
    %c0_7 = arith.constant 0 : index
    %c0_8 = arith.constant 0 : index
    %8 = vector.load %arg4[%c0_7, %c0_8] : memref<8x128xf32, #tpu.memory_space<vmem>>, vector<8x128xf32>
    %9 = arith.addf %8, %7 : vector<8x128xf32>
    %c0_9 = arith.constant 0 : index
    %c0_10 = arith.constant 0 : index
    %10 = vector.load %arg4[%c0_9, %c0_10] : memref<8x128xf32, #tpu.memory_space<vmem>>, vector<8x128xf32>
    tpu.vector_store %arg4[%c0_9, %c0_10], %9 {strides = array<i32>} : memref<8x128xf32, #tpu.memory_space<vmem>>, vector<8x128xf32>,
    %c0_i32_11 = arith.constant 0 : i32
    %11 = arith.cmpi eq, %arg1, %c0_i32_11 : i32
    %12 = arith.extui %11 : i1 to i32
    %c0_i32_12 = arith.constant 0 : i32
    %13 = arith.cmpi ne, %12, %c0_i32_12 : i32
    scf.if %13 {
      %c0_13 = arith.constant 0 : index
      %c0_14 = arith.constant 0 : index
      %14 = vector.load %arg4[%c0_13, %c0_14] : memref<8x128xf32, #tpu.memory_space<vmem>>, vector<8x128xf32>
      %cst = arith.constant dense<0.000000e+00> : vector<8xf32>
      %15 = vector.multi_reduction <add>, %14, %cst [1] : vector<8x128xf32> to vector<8xf32>
      %16 = vector.shape_cast %15 : vector<8xf32> to vector<8x1xf32>
      %cst_15 = arith.constant 3.906250e-03 : f32
      %17 = vector.broadcast %cst_15 : f32 to vector<8x1xf32>
      %18 = arith.mulf %16, %17 : vector<8x1xf32>
      %c0_16 = arith.constant 0 : index
      %c0_17 = arith.constant 0 : index
      %19 = vector.load %arg3[%c0_16, %c0_17] : memref<8x1xf32, #tpu.memory_space<vmem>>, vector<8x1xf32>
      tpu.vector_store %arg3[%c0_16, %c0_17], %18 {strides = array<i32>} : memref<8x1xf32, #tpu.memory_space<vmem>>, vector<8x1xf32>,
    } else {
    }
    return
  }
  func.func @transform_0(%arg0: i32, %arg1: i32) -> (i32, i32) {
    %c0_i32 = arith.constant 0 : i32
    return %arg0, %arg1 : i32, i32
  }
  func.func @transform_1(%arg0: i32, %arg1: i32) -> (i32, i32) {
    %c0_i32 = arith.constant 0 : i32
    %c0_i32_0 = arith.constant 0 : i32
    return %arg0, %c0_i32 : i32, i32
  }
}

</mosaic_0001>

<llo_original>
// kernel: tpu_custom_call.1
$region0: #{tpu_custom_call.1}
  #allocation0 [shape = 'u32[]', space=smem, size = 0x4, offset = 0x4, fixed_abs, tag = 'smem constant byte address 0x4 - core index']
  #allocation1 [shape = 'u32[72,128]{1,0:T(1,128)}', space=vmem, size = 0x9000, scoped, tag = 'internal scratch']
  #allocation2 [shape = 'f32[8,128]{1,0:T(8,128)}', space=vmem, size = 0x1000, scoped, tag = 'scratch operand']
  %s0 = inlined_call_operand.hbm [shape: f32[8,256], index: 0, kind: input, shape index: {}]
  %s1 = inlined_call_operand.vmem [shape: f32[8,1], index: 1, kind: output, shape index: {}]
  %s2 = sld [smem:[#allocation0]]
  $region26: #{tpu_custom_call.1} parent=0
    _
  %s4 = ssub.s32 1, %s2
  %s5 = scalar_select 0, %s4, %s2
  $region1: #{tpu_custom_call.1} parent=0
    #allocation3 [shape = 'u8[8192]{0}', space=vmem, size = 0x2000, scoped, tag = 'input window, operand 0, single buffered']
    #allocation4 [shape = 's32[1]{0}', space=sflag, size = 0x4, scoped, tag = 'scoped memory for tpu_custom_call.1']
    %6 = vsyncpa [#allocation4], 0
    // Predicated region
    $region2: #{tpu_custom_call.1} parent=1 // pred_check
      _
    $region3: #{tpu_custom_call.1} parent=1 // pred_check_branch
      %8 = sbr.rel (0) target = $region5
    $region4: #{tpu_custom_call.1} parent=1 // pred_region
      %10 = vsyncadd [#allocation4], 0
      %s12 = sshll.u32 %s0, 4
      %s13 = int_to_ptr.hbm [resolvable:$true] %s12
      %s14 = sshll.u32 [#allocation3], 4
      %s15 = int_to_ptr.vmem [resolvable:$true] %s14
      %17 = dma.hbm_to_vmem [thread:$0]  %s13, 256, %s15, [#allocation4]
    $region5: #{tpu_custom_call.1} parent=1 // pred_fallthru
      _
    // Predicated region
    $region6: #{tpu_custom_call.1} parent=1 // pred_check
      _
    $region7: #{tpu_custom_call.1} parent=1 // pred_check_branch
      %19 = sbr.rel (0) target = $region9
    $region8: #{tpu_custom_call.1} parent=1 // pred_region
      %21 = dma.done [#allocation4], 256
    $region9: #{tpu_custom_call.1} parent=1 // pred_fallthru
      _
    %p22 = scmp.eq.s32.totalorder 0, 0
    // Predicated region
    $region10: #{tpu_custom_call.1} parent=1 // pred_check
      %p23 = pneg %p22
    $region11: #{tpu_custom_call.1} parent=1 // pred_check_branch
      %25 = sbr.rel (%p23) target = $region13
    $region12: #{tpu_custom_call.1} parent=1 // pred_region
      %26 = vst [vmem:[#allocation2] sm:$0xff] 0.0
    $region13: #{tpu_custom_call.1} parent=1 // pred_fallthru
      _
    %v27 = vld [vmem:[#allocation3] sm:$0xff]
    %v28 = vld [vmem:[#allocation2] sm:$0xff]
    %v29 = vadd.f32 %v28, %v27
    %30 = vst [vmem:[#allocation2] sm:$0xff] %v29
    %v31 = vld [vmem:[#allocation3 + $0x8] sm:$0xff]
    %v32 = vld [vmem:[#allocation2] sm:$0xff]
    %v33 = vadd.f32 %v32, %v31
    %34 = vst [vmem:[#allocation2] sm:$0xff] %v33
    // Predicated region
    $region14: #{tpu_custom_call.1} parent=1 // pred_check
      %p35 = pneg %p22
    $region15: #{tpu_custom_call.1} parent=1 // pred_check_branch
      %37 = sbr.rel (%p35) target = $region17
    $region16: #{tpu_custom_call.1} parent=1 // pred_region
      %v38 = vld [vmem:[#allocation2] sm:$0xff]
      %39 = vadd.xlane.f32.xlu0 %v38
      %v40 = vpop.xlane.xlu0 %39
      %v41 = vmul.f32 %v40, 0.00390625
      %vm42 = vcmask 7168
      %43 = vst.msk [vmem:[%s1] sm:$0xff] %vm42, %v41
    $region17: #{tpu_custom_call.1} parent=1 // pred_fallthru
      _
    // Predicated region
    $region18: #{tpu_custom_call.1} parent=1 // pred_check
      _
    $region19: #{tpu_custom_call.1} parent=1 // pred_check_branch
      %45 = sbr.rel (0) target = $region21
    $region20: #{tpu_custom_call.1} parent=1 // pred_region
      _
    $region21: #{tpu_custom_call.1} parent=1 // pred_fallthru
      _
    // Predicated region
    $region22: #{tpu_custom_call.1} parent=1 // pred_check
      _
    $region23: #{tpu_custom_call.1} parent=1 // pred_check_branch
      %47 = sbr.rel (0) target = $region25
    $region24: #{tpu_custom_call.1} parent=1 // pred_region
      _
    $region25: #{tpu_custom_call.1} parent=1 // pred_fallthru
      _
    %48 = vsyncpa [#allocation4], 1

</llo_original>
